<compile_context>
chip_gen: v7x
topology: tpu7x:2x2x1
jax: 0.10.0
libtpu: 0.0.40
codegen_flags: <defaults>
</compile_context>

<pallas_src>
import functools

import jax
import jax.numpy as jnp
from jax.experimental import pallas as pl
from jax.experimental.pallas import tpu as pltpu


def _round_down(x, m):
    return (x // m) * m


def _vmem_capacity_bytes():
    try:
        return int(pltpu.get_tpu_info().vmem_capacity_bytes)
    except Exception:
        return 64 * 1024 * 1024  # conservative fallback (v7x per-TC VMEM)


def _make_combiner_kernel(b_blk):
    def kernel(x1_ref, x2_ref, w1_ref, w2_ref, b_ref, o_ref):
        # Blocks (pixels on the lane axis, channels on sublanes):
        #   x1_ref: (b_blk, Cin1, t)   x2_ref: (b_blk, Cin2, t)
        #   w1_ref: (Cout, Cin1)       w2_ref: (Cout, Cin2)       b_ref: (Cout, 1)
        #   o_ref : (b_blk, Cout, t)
        w1 = w1_ref[...]
        w2 = w2_ref[...]
        bias = b_ref[...]
        for b in range(b_blk):  # static unroll; b_blk is small (<= 16)
            acc = jnp.dot(w1, x1_ref[b], preferred_element_type=jnp.float32)
            acc = acc + jnp.dot(w2, x2_ref[b], preferred_element_type=jnp.float32)
            # Bias add + narrowing only at the final store (f32 epilogue).
            o_ref[b] = (acc + bias).astype(o_ref.dtype)
    return kernel


def _x_spec(shape, index_map, buffered):
    if buffered is None:
        return pl.BlockSpec(shape, index_map)
    return pl.BlockSpec(shape, index_map, pipeline_mode=buffered)


@functools.partial(jax.jit, static_argnames=("compute_dtype",))
def dec_combiner_cell(x1, x2, weight, log_weight_norm, bias, *, compute_dtype=None):
    """x1: (B, Cin1, H, W), x2: (B, Cin2, H, W)  [NCHW, like PyTorch].

    weight:          (Cout, Cin1+Cin2, 1, 1)
    log_weight_norm: (Cout, 1, 1, 1)
    bias:            (Cout,)
    compute_dtype:   optional streaming dtype (e.g. jnp.bfloat16).  Accumulation
                     and bias epilogue stay f32; default (None) keeps the input
                     dtype for bit-exact parity with the f32 PyTorch module.
    Returns (B, Cout, H, W) in the original input dtype.
    """
    B, Cin1, H, W = x1.shape
    Cin2 = x2.shape[1]
    Cout = weight.shape[0]
    HW = H * W
    out_dtype = x1.dtype

    # --- weight normalization (parameter-setup glue, plain JAX on tiny tensors) ---
    # w_norm = exp(log_weight_norm) * weight / (||weight||_{1,2,3} + 1e-5)
    wn = jnp.sqrt(jnp.sum(weight * weight, axis=(1, 2, 3), keepdims=True))
    w_normalized = jnp.exp(log_weight_norm) * weight / (wn + 1e-5)   # (Cout, Cin, 1, 1)
    w_mat = w_normalized[:, :, 0, 0]                                  # (Cout, Cin1+Cin2)
    b_col = bias.astype(jnp.float32).reshape(Cout, 1)                 # f32 bias epilogue

    # --- NCHW -> (B, C, H*W): contiguous reshape, no transpose, no extra HBM pass ---
    x1_f = x1.reshape(B, Cin1, HW)
    x2_f = x2.reshape(B, Cin2, HW)

    # --- opt-in reduced-precision streaming path ---
    # NOTE: only a net win when upstream producers already emit this dtype (or
    # the convert fuses into them); accumulation precision is unchanged.
    if compute_dtype is not None:
        x1_f = x1_f.astype(compute_dtype)
        x2_f = x2_f.astype(compute_dtype)
        w_mat = w_mat.astype(compute_dtype)
    w1 = w_mat[:, :Cin1]                        # (Cout, Cin1)  -- concat fused away
    w2 = w_mat[:, Cin1:]                        # (Cout, Cin2)

    in_itemsize = jnp.dtype(x1_f.dtype).itemsize
    out_itemsize = jnp.dtype(out_dtype).itemsize
    w_itemsize = jnp.dtype(w_mat.dtype).itemsize

    # --- generation-aware VMEM budgeting (headroom below physical capacity) ---
    vmem_cap = _vmem_capacity_bytes()
    vmem_budget = int(0.85 * vmem_cap)          # leave room for compiler scratch
    tile_budget = int(0.40 * vmem_budget)       # fraction spent on streaming tiles

    # Buffered bytes per (batch element, pixel): up to 3-deep input buffers +
    # double-buffered output.
    per_pixel_bytes = 3 * (Cin1 + Cin2) * in_itemsize + 2 * Cout * out_itemsize

    # --- pixel tile: largest multiple of 128 that fits the tile budget ---
    t_cap = _round_down(max(tile_budget // per_pixel_bytes, 128), 128)
    t_cap = max(128, min(t_cap, 16384))
    if HW <= 128:
        t = HW                                  # full-extent last dim is always legal
    elif HW % 128 == 0:
        t = min(t_cap, HW)
    else:
        t = min(t_cap, _round_down(HW, 128))    # trailing partial block is masked
    n_hw = pl.cdiv(HW, t)

    # --- batch blocking: amortize per-step overhead on small feature maps ---
    per_batch_step_bytes = ((Cin1 + Cin2) * in_itemsize + Cout * out_itemsize) * t
    target_step_bytes = 1 << 20                 # ~1 MiB of traffic per grid step
    b_blk = max(1, min(B, target_step_bytes // max(per_batch_step_bytes, 1)))
    b_blk = min(b_blk, max(1, tile_budget // max(per_pixel_bytes * t, 1)), 16)
    while B % b_blk:                            # only full batch blocks (no padding)
        b_blk -= 1

    total_steps = (B // b_blk) * n_hw
    buffered = pl.Buffered(3) if total_steps > 2 else None
    n_buf_x = 3 if buffered is not None else 2

    # --- VMEM request: working set with slack, capped well below physical VMEM ---
    work_bytes = (n_buf_x * b_blk * (Cin1 + Cin2) * t * in_itemsize
                  + 2 * b_blk * Cout * t * out_itemsize
                  + 2 * (w_mat.size * w_itemsize + Cout * 4))
    vmem_limit = int(min(vmem_budget, max(2 * work_bytes, 8 * 1024 * 1024)))

    flops = 2 * B * HW * (Cin1 + Cin2) * Cout
    bytes_accessed = int((x1_f.size + x2_f.size) * in_itemsize
                         + B * Cout * HW * out_itemsize
                         + w_mat.size * w_itemsize + b_col.size * 4)

    kernel = _make_combiner_kernel(b_blk)

    out_flat = pl.pallas_call(
        kernel,
        out_shape=jax.ShapeDtypeStruct((B, Cout, HW), out_dtype),
        grid_spec=pltpu.PrefetchScalarGridSpec(
            num_scalar_prefetch=0,
            grid=(B // b_blk, n_hw),
            in_specs=[
                _x_spec((b_blk, Cin1, t), lambda i, j: (i, 0, j), buffered),
                _x_spec((b_blk, Cin2, t), lambda i, j: (i, 0, j), buffered),
                pl.BlockSpec((Cout, Cin1), lambda i, j: (0, 0)),
                pl.BlockSpec((Cout, Cin2), lambda i, j: (0, 0)),
                pl.BlockSpec((Cout, 1), lambda i, j: (0, 0)),
            ],
            out_specs=pl.BlockSpec((b_blk, Cout, t), lambda i, j: (i, 0, j)),
        ),
        compiler_params=pltpu.CompilerParams(
            dimension_semantics=("parallel", "parallel"),
            vmem_limit_bytes=vmem_limit),
        cost_estimate=pl.CostEstimate(
            flops=flops, transcendentals=0, bytes_accessed=bytes_accessed),
    )(x1_f, x2_f, w1, w2, b_col)

    # --- (B, Cout, H*W) -> NCHW: free reshape ---
    return out_flat.reshape(B, Cout, H, W)


def _reference(x1, x2, weight, log_weight_norm, bias):
    """Pure-JAX reference mirroring the PyTorch forward."""
    x = jnp.concatenate([x1, x2], axis=1)  # (B, Cin, H, W)
    wn = jnp.sqrt(jnp.sum(weight * weight, axis=(1, 2, 3), keepdims=True))
    w = jnp.exp(log_weight_norm) * weight / (wn + 1e-5)
    w_mat = w[:, :, 0, 0]  # (Cout, Cin)
    return jnp.einsum("bchw,oc->bohw", x, w_mat) + bias.reshape(1, -1, 1, 1)


def _make_inputs(key, B, Cin1, Cin2, Cout, Hs, Ws):
    k_x1, k_x2, k_w, k_b = jax.random.split(key, 4)
    x1 = jax.random.normal(k_x1, (B, Cin1, Hs, Ws), dtype=jnp.float32)
    x2 = jax.random.normal(k_x2, (B, Cin2, Hs, Ws), dtype=jnp.float32)
    # Deterministic parameter init (synthetic; mirrors shapes in Conv2D.__init__).
    weight = 0.1 * jax.random.normal(k_w, (Cout, Cin1 + Cin2, 1, 1), dtype=jnp.float32)
    init_norm = jnp.sqrt(jnp.sum(weight * weight, axis=(1, 2, 3), keepdims=True))
    log_weight_norm = jnp.log(init_norm + 0.01)   # (Cout,1,1,1), as in Conv2D.__init__
    bias = 0.05 * jax.random.normal(k_b, (Cout,), dtype=jnp.float32)
    return x1, x2, weight, log_weight_norm, bias


if __name__ == "__main__":
    key0, key1 = jax.random.split(jax.random.PRNGKey(0), 2)

    # 1) Small decoder-level shapes (single grid step, batch-blocked): exact f32 path.
    args = _make_inputs(key0, B=2, Cin1=4, Cin2=4, Cout=8, Hs=16, Ws=16)
    out = jax.block_until_ready(dec_combiner_cell(*args))
    ref = _reference(*args)
    assert out.shape == (2, 8, 16, 16)
    assert jnp.allclose(out, ref, atol=1e-5, rtol=1e-5), "f32 small: mismatch"

    # 2) Non-multiple-of-128 feature map: trailing partial pixel block, multi-step
    #    grid with triple-buffered inputs.  Still the exact f32 path.
    args2 = _make_inputs(key1, B=2, Cin1=4, Cin2=4, Cout=8, Hs=129, Ws=129)
    out2 = jax.block_until_ready(dec_combiner_cell(*args2))
    ref2 = _reference(*args2)
    assert out2.shape == (2, 8, 129, 129)
    assert jnp.allclose(out2, ref2, atol=1e-5, rtol=1e-5), "f32 partial-block: mismatch"

    # 3) Opt-in bf16 streaming path (f32 accumulation): loose sanity tolerance.
    out3 = jax.block_until_ready(dec_combiner_cell(*args, compute_dtype=jnp.bfloat16))
    assert out3.shape == (2, 8, 16, 16)
    assert jnp.allclose(out3, ref, atol=1e-1, rtol=1e-1), "bf16 path: mismatch"

    print("KERNEL_OK")
</pallas_src>

<mosaic_0001>
module attributes {stable_mosaic.version = 11 : i64} {
  func.func @kernel(%arg0: i32, %arg1: i32, %arg2: memref<2x4x256xf32, #tpu.memory_space<vmem>>, %arg3: memref<2x4x256xf32, #tpu.memory_space<vmem>>, %arg4: memref<8x4xf32, #tpu.memory_space<vmem>>, %arg5: memref<8x4xf32, #tpu.memory_space<vmem>>, %arg6: memref<8x1xf32, #tpu.memory_space<vmem>>, %arg7: memref<2x8x256xf32, #tpu.memory_space<vmem>>) attributes {dimension_semantics = [#tpu.dimension_semantics<parallel>, #tpu.dimension_semantics<parallel>], iteration_bounds = array<i64: 1, 1>, scalar_prefetch = 0 : i64, scratch_operands = 0 : i64, tpu.core_type = #tpu.core_type<tc>, window_params = [{transform_indices = @transform_0, window_bounds = array<i64: 2, 4, 256>}, {transform_indices = @transform_1, window_bounds = array<i64: 2, 4, 256>}, {pipeline_mode = #tpu.pipeline_mode<synchronous>, transform_indices = @transform_2, window_bounds = array<i64: 8, 4>}, {pipeline_mode = #tpu.pipeline_mode<synchronous>, transform_indices = @transform_3, window_bounds = array<i64: 8, 4>}, {pipeline_mode = #tpu.pipeline_mode<synchronous>, transform_indices = @transform_4, window_bounds = array<i64: 8, 1>}, {transform_indices = @transform_5, window_bounds = array<i64: 2, 8, 256>}]} {
    %c0 = arith.constant 0 : index
    %c0_0 = arith.constant 0 : index
    %0 = vector.load %arg4[%c0, %c0_0] : memref<8x4xf32, #tpu.memory_space<vmem>>, vector<8x4xf32>
    %c0_1 = arith.constant 0 : index
    %c0_2 = arith.constant 0 : index
    %1 = vector.load %arg5[%c0_1, %c0_2] : memref<8x4xf32, #tpu.memory_space<vmem>>, vector<8x4xf32>
    %c0_3 = arith.constant 0 : index
    %c0_4 = arith.constant 0 : index
    %2 = vector.load %arg6[%c0_3, %c0_4] : memref<8x1xf32, #tpu.memory_space<vmem>>, vector<8x1xf32>
    %c0_5 = arith.constant 0 : index
    %c0_6 = arith.constant 0 : index
    %c0_7 = arith.constant 0 : index
    %3 = vector.load %arg2[%c0_5, %c0_6, %c0_7] : memref<2x4x256xf32, #tpu.memory_space<vmem>>, vector<1x4x256xf32>
    %4 = vector.shape_cast %3 : vector<1x4x256xf32> to vector<4x256xf32>
    %cst = arith.constant dense<0.000000e+00> : vector<8x256xf32>
    %5 = tpu.matmul %0, %4, %cst {dimension_numbers = #tpu.dot_dimension_numbers<[1], [0], [0], [1], [0, 0, 1, 1], [], []>} : vector<8x4xf32>, vector<4x256xf32>, vector<8x256xf32> -> vector<8x256xf32>
    %c0_8 = arith.constant 0 : index
    %c0_9 = arith.constant 0 : index
    %c0_10 = arith.constant 0 : index
    %6 = vector.load %arg3[%c0_8, %c0_9, %c0_10] : memref<2x4x256xf32, #tpu.memory_space<vmem>>, vector<1x4x256xf32>
    %7 = vector.shape_cast %6 : vector<1x4x256xf32> to vector<4x256xf32>
    %cst_11 = arith.constant dense<0.000000e+00> : vector<8x256xf32>
    %8 = tpu.matmul %1, %7, %cst_11 {dimension_numbers = #tpu.dot_dimension_numbers<[1], [0], [0], [1], [0, 0, 1, 1], [], []>} : vector<8x4xf32>, vector<4x256xf32>, vector<8x256xf32> -> vector<8x256xf32>
    %9 = arith.addf %5, %8 : vector<8x256xf32>
    %10 = vector.broadcast %2 : vector<8x1xf32> to vector<8x256xf32>
    %11 = arith.addf %9, %10 : vector<8x256xf32>
    %c0_12 = arith.constant 0 : index
    %c0_13 = arith.constant 0 : index
    %c0_14 = arith.constant 0 : index
    %12 = vector.load %arg7[%c0_12, %c0_13, %c0_14] : memref<2x8x256xf32, #tpu.memory_space<vmem>>, vector<1x8x256xf32>
    %13 = vector.shape_cast %12 : vector<1x8x256xf32> to vector<8x256xf32>
    %14 = vector.shape_cast %11 : vector<8x256xf32> to vector<1x8x256xf32>
    tpu.vector_store %arg7[%c0_12, %c0_13, %c0_14], %14 {strides = array<i32>} : memref<2x8x256xf32, #tpu.memory_space<vmem>>, vector<1x8x256xf32>,
    %c1 = arith.constant 1 : index
    %c0_15 = arith.constant 0 : index
    %c0_16 = arith.constant 0 : index
    %15 = vector.load %arg2[%c1, %c0_15, %c0_16] : memref<2x4x256xf32, #tpu.memory_space<vmem>>, vector<1x4x256xf32>
    %16 = vector.shape_cast %15 : vector<1x4x256xf32> to vector<4x256xf32>
    %cst_17 = arith.constant dense<0.000000e+00> : vector<8x256xf32>
    %17 = tpu.matmul %0, %16, %cst_17 {dimension_numbers = #tpu.dot_dimension_numbers<[1], [0], [0], [1], [0, 0, 1, 1], [], []>} : vector<8x4xf32>, vector<4x256xf32>, vector<8x256xf32> -> vector<8x256xf32>
    %c1_18 = arith.constant 1 : index
    %c0_19 = arith.constant 0 : index
    %c0_20 = arith.constant 0 : index
    %18 = vector.load %arg3[%c1_18, %c0_19, %c0_20] : memref<2x4x256xf32, #tpu.memory_space<vmem>>, vector<1x4x256xf32>
    %19 = vector.shape_cast %18 : vector<1x4x256xf32> to vector<4x256xf32>
    %cst_21 = arith.constant dense<0.000000e+00> : vector<8x256xf32>
    %20 = tpu.matmul %1, %19, %cst_21 {dimension_numbers = #tpu.dot_dimension_numbers<[1], [0], [0], [1], [0, 0, 1, 1], [], []>} : vector<8x4xf32>, vector<4x256xf32>, vector<8x256xf32> -> vector<8x256xf32>
    %21 = arith.addf %17, %20 : vector<8x256xf32>
    %22 = vector.broadcast %2 : vector<8x1xf32> to vector<8x256xf32>
    %23 = arith.addf %21, %22 : vector<8x256xf32>
    %c1_22 = arith.constant 1 : index
    %c0_23 = arith.constant 0 : index
    %c0_24 = arith.constant 0 : index
    %24 = vector.load %arg7[%c1_22, %c0_23, %c0_24] : memref<2x8x256xf32, #tpu.memory_space<vmem>>, vector<1x8x256xf32>
    %25 = vector.shape_cast %24 : vector<1x8x256xf32> to vector<8x256xf32>
    %26 = vector.shape_cast %23 : vector<8x256xf32> to vector<1x8x256xf32>
    tpu.vector_store %arg7[%c1_22, %c0_23, %c0_24], %26 {strides = array<i32>} : memref<2x8x256xf32, #tpu.memory_space<vmem>>, vector<1x8x256xf32>,
    return
  }
  func.func @transform_0(%arg0: i32, %arg1: i32) -> (i32, i32, i32) {
    %c0_i32 = arith.constant 0 : i32
    %c0_i32_0 = arith.constant 0 : i32
    return %arg0, %c0_i32, %arg1 : i32, i32, i32
  }
  func.func @transform_1(%arg0: i32, %arg1: i32) -> (i32, i32, i32) {
    %c0_i32 = arith.constant 0 : i32
    %c0_i32_0 = arith.constant 0 : i32
    return %arg0, %c0_i32, %arg1 : i32, i32, i32
  }
  func.func @transform_2(%arg0: i32, %arg1: i32) -> (i32, i32) {
    %c0_i32 = arith.constant 0 : i32
    %c0_i32_0 = arith.constant 0 : i32
    %c0_i32_1 = arith.constant 0 : i32
    return %c0_i32, %c0_i32_0 : i32, i32
  }
  func.func @transform_3(%arg0: i32, %arg1: i32) -> (i32, i32) {
    %c0_i32 = arith.constant 0 : i32
    %c0_i32_0 = arith.constant 0 : i32
    %c0_i32_1 = arith.constant 0 : i32
    return %c0_i32, %c0_i32_0 : i32, i32
  }
  func.func @transform_4(%arg0: i32, %arg1: i32) -> (i32, i32) {
    %c0_i32 = arith.constant 0 : i32
    %c0_i32_0 = arith.constant 0 : i32
    %c0_i32_1 = arith.constant 0 : i32
    return %c0_i32, %c0_i32_0 : i32, i32
  }
  func.func @transform_5(%arg0: i32, %arg1: i32) -> (i32, i32, i32) {
    %c0_i32 = arith.constant 0 : i32
    %c0_i32_0 = arith.constant 0 : i32
    return %arg0, %c0_i32, %arg1 : i32, i32, i32
  }
}

</mosaic_0001>

<llo_original>
// kernel: dec_combiner_cell.1
$region0: #{dec_combiner_cell.1}
  #allocation0 [shape = 'u32[]', space=smem, size = 0x4, offset = 0x4, fixed_abs, tag = 'smem constant byte address 0x4 - core index']
  #allocation1 [shape = 'u32[144,128]{1,0:T(1,128)}', space=vmem, size = 0x12000, scoped, tag = 'internal scratch']
  %s0 = inlined_call_operand.vmem [shape: f32[2,4,256], index: 0, kind: input, shape index: {}]
  %s1 = inlined_call_operand.vmem [shape: f32[2,4,256], index: 1, kind: input, shape index: {}]
  %s2 = inlined_call_operand.vmem [shape: f32[8,4], index: 2, kind: input, shape index: {}]
  %s3 = inlined_call_operand.vmem [shape: f32[8,4], index: 3, kind: input, shape index: {}]
  %s4 = inlined_call_operand.vmem [shape: f32[8,1], index: 4, kind: input, shape index: {}]
  %s5 = inlined_call_operand.vmem [shape: f32[2,8,256], index: 5, kind: output, shape index: {}]
  %s6 = sld [smem:[#allocation0]]
  $region30: #{dec_combiner_cell.1} parent=0
    _
  %s8 = ssub.s32 1, %s6
  %s9 = scalar_select 0, %s8, %s6
  // Predicated region
  $region2: #{dec_combiner_cell.1} parent=0 // pred_check
    _
  $region3: #{dec_combiner_cell.1} parent=0 // pred_check_branch
    %11 = sbr.rel (0) target = $region5
  $region4: #{dec_combiner_cell.1} parent=0 // pred_region
    _
  $region5: #{dec_combiner_cell.1} parent=0 // pred_fallthru
    _
  // Predicated region
  $region6: #{dec_combiner_cell.1} parent=0 // pred_check
    _
  $region7: #{dec_combiner_cell.1} parent=0 // pred_check_branch
    %13 = sbr.rel (0) target = $region9
  $region8: #{dec_combiner_cell.1} parent=0 // pred_region
    _
  $region9: #{dec_combiner_cell.1} parent=0 // pred_fallthru
    _
  // Predicated region
  $region10: #{dec_combiner_cell.1} parent=0 // pred_check
    _
  $region11: #{dec_combiner_cell.1} parent=0 // pred_check_branch
    %15 = sbr.rel (0) target = $region13
  $region12: #{dec_combiner_cell.1} parent=0 // pred_region
    _
  $region13: #{dec_combiner_cell.1} parent=0 // pred_fallthru
    _
  // Predicated region
  $region14: #{dec_combiner_cell.1} parent=0 // pred_check
    _
  $region15: #{dec_combiner_cell.1} parent=0 // pred_check_branch
    %17 = sbr.rel (0) target = $region17
  $region16: #{dec_combiner_cell.1} parent=0 // pred_region
    _
  $region17: #{dec_combiner_cell.1} parent=0 // pred_fallthru
    _
  // Predicated region
  $region18: #{dec_combiner_cell.1} parent=0 // pred_check
    _
  $region19: #{dec_combiner_cell.1} parent=0 // pred_check_branch
    %19 = sbr.rel (0) target = $region21
  $region20: #{dec_combiner_cell.1} parent=0 // pred_region
    _
  $region21: #{dec_combiner_cell.1} parent=0 // pred_fallthru
    _
  %v20 = vld [vmem:[%s2] sm:$0xff]
  %v21 = vld [vmem:[%s3] sm:$0xff]
  %v22 = vld [vmem:[%s4] sm:$0xff]
  %v23 = vld [vmem:[%s0] sm:$0xff]
  %v24 = vld [vmem:[%s1] sm:$0xff]
  %v26 = vcombine.high %v24, %v24
  %vm27 = vcmask 31744
  %v29 = vsel %vm27, %v21, 0
  %vm31 = vcmask 1043456
  %v32 = vsel %vm31, %v24, 0
  %v34 = vsel %vm31, %v26, 0
  %36 = vmatprep.subr.mxu0 %v34
  %37 = vmatpush1.msra.mxu0 %v32
  %38 = vmatprep.subr.mxu0 0.0
  %39 = vmatpush1.msra.mxu0 0.0
  %40 = vmatprep.subr.mxu0 0.0
  %41 = vmatpush1.msra.mxu0 0.0
  %42 = vmatprep.subr.mxu0 0.0
  %43 = vmatpush1.msra.mxu0 0.0
  %44 = vmatprep.subr.mxu0 0.0
  %45 = vmatpush1.msra.mxu0 0.0
  %46 = vmatprep.subr.mxu0 0.0
  %47 = vmatpush1.msra.mxu0 0.0
  %48 = vmatprep.subr.mxu0 0.0
  %49 = vmatpush1.msra.mxu0 0.0
  %50 = vmatprep.subr.mxu0 0.0
  %51 = vmatpush1.msra.mxu0 0.0
  %52 = vmatprep.subr.mxu0 0.0
  %53 = vmatpush1.msra.mxu0 0.0
  %54 = vmatprep.subr.mxu0 0.0
  %55 = vmatpush1.msra.mxu0 0.0
  %56 = vmatprep.subr.mxu0 0.0
  %57 = vmatpush1.msra.mxu0 0.0
  %58 = vmatprep.subr.mxu0 0.0
  %59 = vmatpush1.msra.mxu0 0.0
  %60 = vmatprep.subr.mxu0 0.0
  %61 = vmatpush1.msra.mxu0 0.0
  %62 = vmatprep.subr.mxu0 0.0
  %63 = vmatpush1.msra.mxu0 0.0
  %64 = vmatprep.subr.mxu0 0.0
  %65 = vmatpush1.msra.mxu0 0.0
  %66 = vmatprep.subr.mxu0 0.0
  %67 = vmatpush1.msra.mxu0 0.0
  %68 = vmatprep.subr.mxu0 0.0
  %69 = vmatpush1.msra.mxu0 0.0
  %70 = vmatprep.subr.mxu0 0.0
  %71 = vmatpush1.msra.mxu0 0.0
  %72 = vmatprep.subr.mxu0 0.0
  %73 = vmatpush1.msra.mxu0 0.0
  %74 = vmatprep.subr.mxu0 0.0
  %75 = vmatpush1.msra.mxu0 0.0
  %76 = vmatprep.subr.mxu0 0.0
  %77 = vmatpush1.msra.mxu0 0.0
  %78 = vmatprep.subr.mxu0 0.0
  %79 = vmatpush1.msra.mxu0 0.0
  %80 = vmatprep.subr.mxu0 0.0
  %81 = vmatpush1.msra.mxu0 0.0
  %82 = vmatprep.subr.mxu0 0.0
  %83 = vmatpush1.msra.mxu0 0.0
  %84 = vmatprep.subr.mxu0 0.0
  %85 = vmatpush1.msra.mxu0 0.0
  %86 = vmatprep.subr.mxu0 0.0
  %87 = vmatpush1.msra.mxu0 0.0
  %88 = vmatprep.subr.mxu0 0.0
  %89 = vmatpush1.msra.mxu0 0.0
  %90 = vmatprep.subr.mxu0 0.0
  %91 = vmatpush1.msra.mxu0 0.0
  %92 = vmatprep.subr.mxu0 0.0
  %93 = vmatpush1.msra.mxu0 0.0
  %94 = vmatprep.subr.mxu0 0.0
  %95 = vmatpush1.msra.mxu0 0.0
  %96 = vmatprep.subr.mxu0 0.0
  %97 = vmatpush1.msra.mxu0 0.0
  %98 = vmatprep.subr.mxu0 0.0
  %99 = vmatpush1.msra.mxu0 0.0
  %100 = vmatprep.mubr.f32.mxu0 0.0
  %101 = vmatmul.mubr.f32.gmra.mrb[0].mxu0 %v29
  %v102 = vpop.f32.mrb[0].mxu0
  %v103 = vadd.f32 0.0, %v102
  %v104 = vpop.f32.mrb[0].mxu0
  %v105 = vadd.f32 0.0, %v104
  %106 = vdwg.mxu0
  %v108 = vcombine.high %v23, %v23
  %v110 = vsel %vm27, %v20, 0
  %v112 = vsel %vm31, %v23, 0
  %v114 = vsel %vm31, %v108, 0
  %116 = vmatprep.subr.mxu0 %v114
  %117 = vmatpush1.msra.mxu0 %v112
  %118 = vmatprep.subr.mxu0 0.0
  %119 = vmatpush1.msra.mxu0 0.0
  %120 = vmatprep.subr.mxu0 0.0
  %121 = vmatpush1.msra.mxu0 0.0
  %122 = vmatprep.subr.mxu0 0.0
  %123 = vmatpush1.msra.mxu0 0.0
  %124 = vmatprep.subr.mxu0 0.0
  %125 = vmatpush1.msra.mxu0 0.0
  %126 = vmatprep.subr.mxu0 0.0
  %127 = vmatpush1.msra.mxu0 0.0
  %128 = vmatprep.subr.mxu0 0.0
  %129 = vmatpush1.msra.mxu0 0.0
  %130 = vmatprep.subr.mxu0 0.0
  %131 = vmatpush1.msra.mxu0 0.0
  %132 = vmatprep.subr.mxu0 0.0
  %133 = vmatpush1.msra.mxu0 0.0
  %134 = vmatprep.subr.mxu0 0.0
  %135 = vmatpush1.msra.mxu0 0.0
  %136 = vmatprep.subr.mxu0 0.0
  %137 = vmatpush1.msra.mxu0 0.0
  %138 = vmatprep.subr.mxu0 0.0
  %139 = vmatpush1.msra.mxu0 0.0
  %140 = vmatprep.subr.mxu0 0.0
  %141 = vmatpush1.msra.mxu0 0.0
  %142 = vmatprep.subr.mxu0 0.0
  %143 = vmatpush1.msra.mxu0 0.0
  %144 = vmatprep.subr.mxu0 0.0
  %145 = vmatpush1.msra.mxu0 0.0
  %146 = vmatprep.subr.mxu0 0.0
  %147 = vmatpush1.msra.mxu0 0.0
  %148 = vmatprep.subr.mxu0 0.0
  %149 = vmatpush1.msra.mxu0 0.0
  %150 = vmatprep.subr.mxu0 0.0
  %151 = vmatpush1.msra.mxu0 0.0
  %152 = vmatprep.subr.mxu0 0.0
  %153 = vmatpush1.msra.mxu0 0.0
  %154 = vmatprep.subr.mxu0 0.0
  %155 = vmatpush1.msra.mxu0 0.0
  %156 = vmatprep.subr.mxu0 0.0
  %157 = vmatpush1.msra.mxu0 0.0
  %158 = vmatprep.subr.mxu0 0.0
  %159 = vmatpush1.msra.mxu0 0.0
  %160 = vmatprep.subr.mxu0 0.0
  %161 = vmatpush1.msra.mxu0 0.0
  %162 = vmatprep.subr.mxu0 0.0
  %163 = vmatpush1.msra.mxu0 0.0
  %164 = vmatprep.subr.mxu0 0.0
  %165 = vmatpush1.msra.mxu0 0.0
  %166 = vmatprep.subr.mxu0 0.0
  %167 = vmatpush1.msra.mxu0 0.0
  %168 = vmatprep.subr.mxu0 0.0
  %169 = vmatpush1.msra.mxu0 0.0
  %170 = vmatprep.subr.mxu0 0.0
  %171 = vmatpush1.msra.mxu0 0.0
  %172 = vmatprep.subr.mxu0 0.0
  %173 = vmatpush1.msra.mxu0 0.0
  %174 = vmatprep.subr.mxu0 0.0
  %175 = vmatpush1.msra.mxu0 0.0
  %176 = vmatprep.subr.mxu0 0.0
  %177 = vmatpush1.msra.mxu0 0.0
  %178 = vmatprep.subr.mxu0 0.0
  %179 = vmatpush1.msra.mxu0 0.0
  %180 = vmatprep.mubr.f32.mxu0 0.0
  %181 = vmatmul.mubr.f32.gmra.mrb[0].mxu0 %v110
  %v182 = vpop.f32.mrb[0].mxu0
  %v183 = vadd.f32 %v103, %v182
  %v184 = vpop.f32.mrb[0].mxu0
  %v185 = vadd.f32 %v105, %v184
  %186 = vdwg.mxu0
  %188 = vset.pattern.permute.xlu0 0
  %189 = vperm.xlu0 %188, %v22
  %v190 = vpop.permute.xlu0 %189
  %v192 = vadd.f32 %v183, %v190
  %v193 = vadd.f32 %v185, %v190
  %194 = vst [vmem:[%s5] sm:$0xff] %v192
  %195 = vst [vmem:[%s5 + $0x8] sm:$0xff] %v193
  %s196 = scalar_lea.vmem %s0, 8
  %v197 = vld [vmem:[%s196] sm:$0xff]
  %s198 = scalar_lea.vmem %s1, 8
  %v199 = vld [vmem:[%s198] sm:$0xff]
  %v201 = vcombine.high %v199, %v199
  %v202 = vsel %vm31, %v199, 0
  %v204 = vsel %vm31, %v201, 0
  %206 = vmatprep.subr.mxu0 %v204
  %207 = vmatpush1.msra.mxu0 %v202
  %208 = vmatprep.subr.mxu0 0.0
  %209 = vmatpush1.msra.mxu0 0.0
  %210 = vmatprep.subr.mxu0 0.0
  %211 = vmatpush1.msra.mxu0 0.0
  %212 = vmatprep.subr.mxu0 0.0
  %213 = vmatpush1.msra.mxu0 0.0
  %214 = vmatprep.subr.mxu0 0.0
  %215 = vmatpush1.msra.mxu0 0.0
  %216 = vmatprep.subr.mxu0 0.0
  %217 = vmatpush1.msra.mxu0 0.0
  %218 = vmatprep.subr.mxu0 0.0
  %219 = vmatpush1.msra.mxu0 0.0
  %220 = vmatprep.subr.mxu0 0.0
  %221 = vmatpush1.msra.mxu0 0.0
  %222 = vmatprep.subr.mxu0 0.0
  %223 = vmatpush1.msra.mxu0 0.0
  %224 = vmatprep.subr.mxu0 0.0
  %225 = vmatpush1.msra.mxu0 0.0
  %226 = vmatprep.subr.mxu0 0.0
  %227 = vmatpush1.msra.mxu0 0.0
  %228 = vmatprep.subr.mxu0 0.0
  %229 = vmatpush1.msra.mxu0 0.0
  %230 = vmatprep.subr.mxu0 0.0
  %231 = vmatpush1.msra.mxu0 0.0
  %232 = vmatprep.subr.mxu0 0.0
  %233 = vmatpush1.msra.mxu0 0.0
  %234 = vmatprep.subr.mxu0 0.0
  %235 = vmatpush1.msra.mxu0 0.0
  %236 = vmatprep.subr.mxu0 0.0
  %237 = vmatpush1.msra.mxu0 0.0
  %238 = vmatprep.subr.mxu0 0.0
  %239 = vmatpush1.msra.mxu0 0.0
  %240 = vmatprep.subr.mxu0 0.0
  %241 = vmatpush1.msra.mxu0 0.0
  %242 = vmatprep.subr.mxu0 0.0
  %243 = vmatpush1.msra.mxu0 0.0
  %244 = vmatprep.subr.mxu0 0.0
  %245 = vmatpush1.msra.mxu0 0.0
  %246 = vmatprep.subr.mxu0 0.0
  %247 = vmatpush1.msra.mxu0 0.0
  %248 = vmatprep.subr.mxu0 0.0
  %249 = vmatpush1.msra.mxu0 0.0
  %250 = vmatprep.subr.mxu0 0.0
  %251 = vmatpush1.msra.mxu0 0.0
  %252 = vmatprep.subr.mxu0 0.0
  %253 = vmatpush1.msra.mxu0 0.0
  %254 = vmatprep.subr.mxu0 0.0
  %255 = vmatpush1.msra.mxu0 0.0
  %256 = vmatprep.subr.mxu0 0.0
  %257 = vmatpush1.msra.mxu0 0.0
  %258 = vmatprep.subr.mxu0 0.0
  %259 = vmatpush1.msra.mxu0 0.0
  %260 = vmatprep.subr.mxu0 0.0
  %261 = vmatpush1.msra.mxu0 0.0
  %262 = vmatprep.subr.mxu0 0.0
  %263 = vmatpush1.msra.mxu0 0.0
  %264 = vmatprep.subr.mxu0 0.0
  %265 = vmatpush1.msra.mxu0 0.0
  %266 = vmatprep.subr.mxu0 0.0
  %267 = vmatpush1.msra.mxu0 0.0
  %268 = vmatprep.subr.mxu0 0.0
  %269 = vmatpush1.msra.mxu0 0.0
  %270 = vmatprep.mubr.f32.mxu0 0.0
  %271 = vmatmul.mubr.f32.gmra.mrb[0].mxu0 %v29
  %v272 = vpop.f32.mrb[0].mxu0
  %v273 = vadd.f32 0.0, %v272
  %v274 = vpop.f32.mrb[0].mxu0
  %v275 = vadd.f32 0.0, %v274
  %276 = vdwg.mxu0
  %v278 = vcombine.high %v197, %v197
  %v279 = vsel %vm31, %v197, 0
  %v281 = vsel %vm31, %v278, 0
  %283 = vmatprep.subr.mxu0 %v281
  %284 = vmatpush1.msra.mxu0 %v279
  %285 = vmatprep.subr.mxu0 0.0
  %286 = vmatpush1.msra.mxu0 0.0
  %287 = vmatprep.subr.mxu0 0.0
  %288 = vmatpush1.msra.mxu0 0.0
  %289 = vmatprep.subr.mxu0 0.0
  %290 = vmatpush1.msra.mxu0 0.0
  %291 = vmatprep.subr.mxu0 0.0
  %292 = vmatpush1.msra.mxu0 0.0
  %293 = vmatprep.subr.mxu0 0.0
  %294 = vmatpush1.msra.mxu0 0.0
  %295 = vmatprep.subr.mxu0 0.0
  %296 = vmatpush1.msra.mxu0 0.0
  %297 = vmatprep.subr.mxu0 0.0
  %298 = vmatpush1.msra.mxu0 0.0
  %299 = vmatprep.subr.mxu0 0.0
  %300 = vmatpush1.msra.mxu0 0.0
  %301 = vmatprep.subr.mxu0 0.0
  %302 = vmatpush1.msra.mxu0 0.0
  %303 = vmatprep.subr.mxu0 0.0
  %304 = vmatpush1.msra.mxu0 0.0
  %305 = vmatprep.subr.mxu0 0.0
  %306 = vmatpush1.msra.mxu0 0.0
  %307 = vmatprep.subr.mxu0 0.0
  %308 = vmatpush1.msra.mxu0 0.0
  %309 = vmatprep.subr.mxu0 0.0
  %310 = vmatpush1.msra.mxu0 0.0
  %311 = vmatprep.subr.mxu0 0.0
  %312 = vmatpush1.msra.mxu0 0.0
  %313 = vmatprep.subr.mxu0 0.0
  %314 = vmatpush1.msra.mxu0 0.0
  %315 = vmatprep.subr.mxu0 0.0
  %316 = vmatpush1.msra.mxu0 0.0
  %317 = vmatprep.subr.mxu0 0.0
  %318 = vmatpush1.msra.mxu0 0.0
  %319 = vmatprep.subr.mxu0 0.0
  %320 = vmatpush1.msra.mxu0 0.0
  %321 = vmatprep.subr.mxu0 0.0
  %322 = vmatpush1.msra.mxu0 0.0
  %323 = vmatprep.subr.mxu0 0.0
  %324 = vmatpush1.msra.mxu0 0.0
  %325 = vmatprep.subr.mxu0 0.0
  %326 = vmatpush1.msra.mxu0 0.0
  %327 = vmatprep.subr.mxu0 0.0
  %328 = vmatpush1.msra.mxu0 0.0
  %329 = vmatprep.subr.mxu0 0.0
  %330 = vmatpush1.msra.mxu0 0.0
  %331 = vmatprep.subr.mxu0 0.0
  %332 = vmatpush1.msra.mxu0 0.0
  %333 = vmatprep.subr.mxu0 0.0
  %334 = vmatpush1.msra.mxu0 0.0
  %335 = vmatprep.subr.mxu0 0.0
  %336 = vmatpush1.msra.mxu0 0.0
  %337 = vmatprep.subr.mxu0 0.0
  %338 = vmatpush1.msra.mxu0 0.0
  %339 = vmatprep.subr.mxu0 0.0
  %340 = vmatpush1.msra.mxu0 0.0
  %341 = vmatprep.subr.mxu0 0.0
  %342 = vmatpush1.msra.mxu0 0.0
  %343 = vmatprep.subr.mxu0 0.0
  %344 = vmatpush1.msra.mxu0 0.0
  %345 = vmatprep.subr.mxu0 0.0
  %346 = vmatpush1.msra.mxu0 0.0
  %347 = vmatprep.mubr.f32.mxu0 0.0
  %348 = vmatmul.mubr.f32.gmra.mrb[0].mxu0 %v110
  %v349 = vpop.f32.mrb[0].mxu0
  %v350 = vadd.f32 %v273, %v349
  %v351 = vpop.f32.mrb[0].mxu0
  %v352 = vadd.f32 %v275, %v351
  %353 = vdwg.mxu0
  %v354 = vadd.f32 %v350, %v190
  %v355 = vadd.f32 %v352, %v190
  %s356 = scalar_lea.vmem %s5, 16
  %357 = vst [vmem:[%s356] sm:$0xff] %v354
  %358 = vst [vmem:[%s356 + $0x8] sm:$0xff] %v355
  // Predicated region
  $region22: #{dec_combiner_cell.1} parent=0 // pred_check
    _
  $region23: #{dec_combiner_cell.1} parent=0 // pred_check_branch
    %360 = sbr.rel (0) target = $region25
  $region24: #{dec_combiner_cell.1} parent=0 // pred_region
    _
  $region25: #{dec_combiner_cell.1} parent=0 // pred_fallthru
    _
  // Predicated region
  $region26: #{dec_combiner_cell.1} parent=0 // pred_check
    _
  $region27: #{dec_combiner_cell.1} parent=0 // pred_check_branch
    %362 = sbr.rel (0) target = $region29
  $region28: #{dec_combiner_cell.1} parent=0 // pred_region
    _
  $region29: #{dec_combiner_cell.1} parent=0 // pred_fallthru
    _

</llo_original>
